<compile_context>
chip_gen: v7x
topology: tpu7x:2x2x1
jax: 0.10.0
libtpu: 0.0.40
codegen_flags: <defaults>
</compile_context>

<pallas_src>
import functools

import jax
import jax.numpy as jnp
from jax.experimental import pallas as pl
from jax.experimental.pallas import tpu as pltpu


def _round_up(x, m):
    return (x + m - 1) // m * m


def _elu(x):
    # ELU(alpha=1): x if x > 0 else expm1(x); clamp so the untaken branch of
    # the where never sees a huge exp argument.
    return jnp.where(x > 0, x, jnp.expm1(jnp.minimum(x, 0.0)))


def _tpu_vmem_bytes():
    try:
        return int(pltpu.get_tpu_info().vmem_capacity_bytes)
    except Exception:
        return 64 * 1024 * 1024  # conservative (v7x-sized) fallback


def _pick_tile_rows(n_rows, input_dim, h_pad, out_itemsize, vmem_bytes):
    # A (TM, input_dim) bf16 block pads its lane dim to 128 in VMEM, so the
    # per-row VMEM cost is ~max(input_dim,128)*2 B for e plus h_pad*itemsize
    # for the output tile, each double-buffered by the pipeline.  Keep the
    # pipelined working set to ~1/8 of physical VMEM (v5e/v6e: ~16 MiB,
    # v7x: ~8 MiB) so the resident weight + scale/shift + scratch fit easily.
    budget = vmem_bytes // 8
    per_row = 2 * (max(input_dim, 128) * 2 + h_pad * out_itemsize)
    tm = int(budget // per_row) // 16 * 16
    tm = max(16, min(tm, 8192))
    return min(tm, _round_up(n_rows, 16))


def _bn_stats_kernel(e_ref, w_ref, gb_ref, ss_ref,
                     sum_ref, sumsq_ref, shift_ref,
                     *, n_rows, inv_n, bn_eps, needs_mask):
    i = pl.program_id(0)

    # bf16 operands on the MXU, f32 accumulation.
    h = jnp.dot(e_ref[...], w_ref[...], preferred_element_type=jnp.float32)
    tm = h.shape[0]

    @pl.when(i == 0)
    def _():
        # Per-feature shift (approximate mean from the first tile): shifted
        # one-pass variance E[(x-r)^2] - E[x-r]^2 avoids catastrophic
        # cancellation when |mean| >> std.
        shift_ref[...] = jnp.sum(h, axis=0, keepdims=True) * (1.0 / tm)
        sum_ref[...] = jnp.zeros_like(sum_ref)
        sumsq_ref[...] = jnp.zeros_like(sumsq_ref)

    hc = h - shift_ref[...]
    if needs_mask:
        row = i * tm + jax.lax.broadcasted_iota(jnp.int32, (tm, 1), 0)
        hc = jnp.where(row < n_rows, hc, 0.0)  # padded rows contribute nothing
    sum_ref[...] += jnp.sum(hc, axis=0, keepdims=True)
    sumsq_ref[...] += jnp.sum(hc * hc, axis=0, keepdims=True)

    @pl.when(i == pl.num_programs(0) - 1)
    def _():
        m_c = sum_ref[...] * inv_n                                   # E[x - r]
        var = jnp.maximum(sumsq_ref[...] * inv_n - m_c * m_c, 0.0)   # biased var
        mean = m_c + shift_ref[...]
        scale = gb_ref[0:1, :] * jax.lax.rsqrt(var + bn_eps)         # gamma/std
        ss_ref[0:1, :] = scale
        ss_ref[1:2, :] = gb_ref[1:2, :] - mean * scale               # beta - mean*scale


def _bn_apply_kernel(e_ref, w_ref, ss_ref, out_ref):
    h = jnp.dot(e_ref[...], w_ref[...], preferred_element_type=jnp.float32)
    y = h * ss_ref[0:1, :] + ss_ref[1:2, :]
    out_ref[...] = _elu(y).astype(out_ref.dtype)


def prepool_forward(h, params, *, input_dim, bn_eps=1e-5, out_dtype=jnp.float32):
    """PrePool forward.  h: any shape flattening to [-1, input_dim]."""
    e = jnp.reshape(h, (-1, input_dim))
    n = e.shape[0]
    w = params["w"]                      # [input_dim, hidden] (pre-transposed)
    hidden = w.shape[1]

    if n == 1:
        # PyTorch skips BN for a single row; a [1,K]x[K,H] matvec is dominated
        # by pallas_call launch / DMA-descriptor overhead, so let XLA fuse it.
        y = jnp.dot(e.astype(jnp.bfloat16), w.astype(jnp.bfloat16),
                    preferred_element_type=jnp.float32) + params["b"]
        return _elu(y).astype(out_dtype)

    # ---- padding to lane/sublane-friendly shapes --------------------------
    h_pad = _round_up(hidden, 128)       # lane-dense output slab (no vst.msk)
    out_itemsize = jnp.dtype(out_dtype).itemsize
    vmem_bytes = _tpu_vmem_bytes()
    tm = _pick_tile_rows(n, input_dim, h_pad, out_itemsize, vmem_bytes)
    n_pad = _round_up(n, tm)
    grid = (n_pad // tm,)
    needs_mask = n_pad != n

    e_bf = e.astype(jnp.bfloat16)        # halves activation HBM traffic
    if n_pad != n:
        e_bf = jnp.pad(e_bf, ((0, n_pad - n), (0, 0)))
    w_bf = w.astype(jnp.bfloat16)
    gamma, beta = params["gamma"], params["beta"]
    if h_pad != hidden:
        w_bf = jnp.pad(w_bf, ((0, 0), (0, h_pad - hidden)))
        gamma = jnp.pad(gamma, ((0, 0), (0, h_pad - hidden)), constant_values=1.0)
        beta = jnp.pad(beta, ((0, 0), (0, h_pad - hidden)))
    gb = jnp.concatenate([gamma, beta], axis=0)      # [2, h_pad] packed vectors

    vmem_limit = int(min(vmem_bytes, 128 * 1024 * 1024) // 2)

    e_spec = pl.BlockSpec((tm, input_dim), lambda i: (i, 0))
    w_spec = pl.BlockSpec((input_dim, h_pad), lambda i: (0, 0))   # stays resident
    vec_spec = pl.BlockSpec((2, h_pad), lambda i: (0, 0))         # stays resident

    matmul_flops = 2 * n_pad * input_dim * h_pad

    # ---- pass 1: batch statistics -> per-feature scale/shift --------------
    stats_cost = pl.CostEstimate(
        flops=matmul_flops + 4 * n_pad * h_pad,
        transcendentals=h_pad,
        bytes_accessed=e_bf.size * 2 + w_bf.size * 2 + gb.size * 4 + 2 * h_pad * 4,
    )
    scale_shift = pl.pallas_call(
        functools.partial(_bn_stats_kernel, n_rows=n, inv_n=1.0 / n,
                          bn_eps=bn_eps, needs_mask=needs_mask),
        out_shape=jax.ShapeDtypeStruct((2, h_pad), jnp.float32),
        grid_spec=pltpu.PrefetchScalarGridSpec(
            num_scalar_prefetch=0,
            grid=grid,
            in_specs=[e_spec, w_spec, vec_spec],
            out_specs=pl.BlockSpec((2, h_pad), lambda i: (0, 0)),
            scratch_shapes=[pltpu.VMEM((1, h_pad), jnp.float32),
                            pltpu.VMEM((1, h_pad), jnp.float32),
                            pltpu.VMEM((1, h_pad), jnp.float32)]),
        compiler_params=pltpu.CompilerParams(
            dimension_semantics=("arbitrary",),      # sequential accumulation
            vmem_limit_bytes=vmem_limit),
        cost_estimate=stats_cost,
    )(e_bf, w_bf, gb)

    # ---- pass 2: recompute matmul, normalize + ELU, lane-dense store ------
    apply_cost = pl.CostEstimate(
        flops=matmul_flops + 2 * n_pad * h_pad,
        transcendentals=n_pad * h_pad,               # ELU expm1
        bytes_accessed=(e_bf.size * 2 + w_bf.size * 2 + 2 * h_pad * 4
                        + n_pad * h_pad * out_itemsize),
    )
    out = pl.pallas_call(
        _bn_apply_kernel,
        out_shape=jax.ShapeDtypeStruct((n_pad, h_pad), out_dtype),
        grid_spec=pltpu.PrefetchScalarGridSpec(
            num_scalar_prefetch=0,
            grid=grid,
            in_specs=[e_spec, w_spec, vec_spec],
            out_specs=pl.BlockSpec((tm, h_pad), lambda i: (i, 0))),
        compiler_params=pltpu.CompilerParams(
            dimension_semantics=("parallel",),       # shards tiles over v7x's 2 TCs
            vmem_limit_bytes=vmem_limit),
        cost_estimate=apply_cost,
    )(e_bf, w_bf, scale_shift)
    # If profiling shows exposed DMA after tiling, the next lever is
    # pipeline_mode=pl.Buffered(3) on e_spec / out_specs (kept default here).
    return out[:n, :hidden]


def init_prepool_params(key, input_dim, hidden_dim):
    """PyTorch-default-style init.  Linear weight stored [in, out] (transposed)."""
    kw, kb = jax.random.split(key)
    bound = 1.0 / float(jnp.sqrt(jnp.float32(input_dim)))
    w = jax.random.uniform(kw, (input_dim, hidden_dim), jnp.float32, -bound, bound)
    b = jax.random.uniform(kb, (1, hidden_dim), jnp.float32, -bound, bound)
    return {
        "w": w,
        "b": b,
        "gamma": jnp.ones((1, hidden_dim), jnp.float32),
        "beta": jnp.zeros((1, hidden_dim), jnp.float32),
    }


def _reference(h, params, input_dim, bn_eps=1e-5):
    """Pure-JAX reference (same bf16 matmul operands as the kernel)."""
    e = jnp.reshape(h, (-1, input_dim))
    y = jnp.dot(e.astype(jnp.bfloat16), params["w"].astype(jnp.bfloat16),
                preferred_element_type=jnp.float32)
    if e.shape[0] != 1:
        m = y.mean(0, keepdims=True)
        v = ((y - m) ** 2).mean(0, keepdims=True)    # biased (training-mode BN)
        y = (y - m) / jnp.sqrt(v + bn_eps) * params["gamma"] + params["beta"]
        # Linear bias cancels exactly under training-mode BN.
    else:
        y = y + params["b"]
    return jnp.where(y > 0, y, jnp.expm1(jnp.minimum(y, 0.0)))


if __name__ == "__main__":
    key = jax.random.PRNGKey(0)
    k_h, k_h1, k_h2, k_p, k_p2 = jax.random.split(key, 5)

    # BN path, lane-aligned hidden: h (2,4,32) -> e (8,32), hidden=128.
    input_dim, hidden_dim = 32, 128
    params = init_prepool_params(k_p, input_dim, hidden_dim)
    h = jax.random.normal(k_h, (2, 4, input_dim), jnp.float32)
    out = prepool_forward(h, params, input_dim=input_dim)
    jax.block_until_ready(out)
    ref = _reference(h, params, input_dim)
    assert out.shape == (8, hidden_dim)
    assert jnp.allclose(out, ref, atol=2e-4, rtol=1e-4), "BN path mismatch"

    # BN path, ragged shapes: hidden=96 (lane padding) and N=10 (row masking).
    params96 = init_prepool_params(k_p2, input_dim, 96)
    h2 = jax.random.normal(k_h2, (10, input_dim), jnp.float32)
    out2 = prepool_forward(h2, params96, input_dim=input_dim)
    jax.block_until_ready(out2)
    ref2 = _reference(h2, params96, input_dim)
    assert out2.shape == (10, 96)
    assert jnp.allclose(out2, ref2, atol=2e-4, rtol=1e-4), "ragged BN path mismatch"

    # N == 1 path: BN skipped, Linear bias applied (plain XLA, no pallas_call).
    h1 = jax.random.normal(k_h1, (1, input_dim), jnp.float32)
    out1 = prepool_forward(h1, params, input_dim=input_dim)
    jax.block_until_ready(out1)
    ref1 = _reference(h1, params, input_dim)
    assert jnp.allclose(out1, ref1, atol=2e-4, rtol=1e-4), "N==1 path mismatch"

    print("KERNEL_OK")
</pallas_src>

<mosaic_0001>
module attributes {stable_mosaic.version = 11 : i64} {
  func.func @_bn_stats_kernel(%arg0: i32, %arg1: memref<16x32xbf16, #tpu.memory_space<vmem>>, %arg2: memref<32x128xbf16, #tpu.memory_space<vmem>>, %arg3: memref<2x128xf32, #tpu.memory_space<vmem>>, %arg4: memref<2x128xf32, #tpu.memory_space<vmem>>, %arg5: memref<1x128xf32, #tpu.memory_space<vmem>>, %arg6: memref<1x128xf32, #tpu.memory_space<vmem>>, %arg7: memref<1x128xf32, #tpu.memory_space<vmem>>) attributes {dimension_semantics = [#tpu.dimension_semantics<arbitrary>], iteration_bounds = array<i64: 1>, scalar_prefetch = 0 : i64, scratch_operands = 3 : i64, tpu.core_type = #tpu.core_type<tc>, window_params = [{transform_indices = @transform_0, window_bounds = array<i64: 16, 32>}, {pipeline_mode = #tpu.pipeline_mode<synchronous>, transform_indices = @transform_1, window_bounds = array<i64: 32, 128>}, {pipeline_mode = #tpu.pipeline_mode<synchronous>, transform_indices = @transform_2, window_bounds = array<i64: 2, 128>}, {pipeline_mode = #tpu.pipeline_mode<synchronous>, transform_indices = @transform_3, window_bounds = array<i64: 2, 128>}]} {
    %c0 = arith.constant 0 : index
    %c0_0 = arith.constant 0 : index
    %0 = vector.load %arg1[%c0, %c0_0] : memref<16x32xbf16, #tpu.memory_space<vmem>>, vector<16x32xbf16>
    %c0_1 = arith.constant 0 : index
    %c0_2 = arith.constant 0 : index
    %1 = vector.load %arg2[%c0_1, %c0_2] : memref<32x128xbf16, #tpu.memory_space<vmem>>, vector<32x128xbf16>
    %cst = arith.constant dense<0.000000e+00> : vector<16x128xf32>
    %2 = tpu.matmul %0, %1, %cst {dimension_numbers = #tpu.dot_dimension_numbers<[1], [0], [0], [1], [0, 0, 1, 1], [], []>} : vector<16x32xbf16>, vector<32x128xbf16>, vector<16x128xf32> -> vector<16x128xf32>
    %c0_i32 = arith.constant 0 : i32
    %3 = arith.cmpi eq, %arg0, %c0_i32 : i32
    %4 = arith.extui %3 : i1 to i32
    %c0_i32_3 = arith.constant 0 : i32
    %5 = arith.cmpi ne, %4, %c0_i32_3 : i32
    scf.if %5 {
      %cst_19 = arith.constant dense<0.000000e+00> : vector<128xf32>
      %33 = vector.multi_reduction <add>, %2, %cst_19 [0] : vector<16x128xf32> to vector<128xf32>
      %34 = vector.shape_cast %33 : vector<128xf32> to vector<1x128xf32>
      %cst_20 = arith.constant 6.250000e-02 : f32
      %35 = vector.broadcast %cst_20 : f32 to vector<1x128xf32>
      %36 = arith.mulf %34, %35 : vector<1x128xf32>
      %c0_21 = arith.constant 0 : index
      %c0_22 = arith.constant 0 : index
      %37 = vector.load %arg7[%c0_21, %c0_22] : memref<1x128xf32, #tpu.memory_space<vmem>>, vector<1x128xf32>
      tpu.vector_store %arg7[%c0_21, %c0_22], %36 {strides = array<i32>} : memref<1x128xf32, #tpu.memory_space<vmem>>, vector<1x128xf32>,
      %cst_23 = arith.constant 0.000000e+00 : f32
      %38 = vector.broadcast %cst_23 : f32 to vector<1x128xf32>
      %c0_24 = arith.constant 0 : index
      %c0_25 = arith.constant 0 : index
      %39 = vector.load %arg5[%c0_24, %c0_25] : memref<1x128xf32, #tpu.memory_space<vmem>>, vector<1x128xf32>
      tpu.vector_store %arg5[%c0_24, %c0_25], %38 {strides = array<i32>} : memref<1x128xf32, #tpu.memory_space<vmem>>, vector<1x128xf32>,
      %cst_26 = arith.constant 0.000000e+00 : f32
      %40 = vector.broadcast %cst_26 : f32 to vector<1x128xf32>
      %c0_27 = arith.constant 0 : index
      %c0_28 = arith.constant 0 : index
      %41 = vector.load %arg6[%c0_27, %c0_28] : memref<1x128xf32, #tpu.memory_space<vmem>>, vector<1x128xf32>
      tpu.vector_store %arg6[%c0_27, %c0_28], %40 {strides = array<i32>} : memref<1x128xf32, #tpu.memory_space<vmem>>, vector<1x128xf32>,
    } else {
    }
    %c0_4 = arith.constant 0 : index
    %c0_5 = arith.constant 0 : index
    %6 = vector.load %arg7[%c0_4, %c0_5] : memref<1x128xf32, #tpu.memory_space<vmem>>, vector<1x128xf32>
    %7 = vector.broadcast %6 : vector<1x128xf32> to vector<16x128xf32>
    %8 = arith.subf %2, %7 : vector<16x128xf32>
    %c16_i32 = arith.constant 16 : i32
    %9 = arith.muli %arg0, %c16_i32 : i32
    %10 = tpu.iota {dimensions = array<i32: 0>} : vector<16x1xi32>
    %11 = vector.broadcast %9 : i32 to vector<16x1xi32>
    %12 = arith.addi %11, %10 : vector<16x1xi32>
    %c8_i32 = arith.constant 8 : i32
    %13 = vector.broadcast %c8_i32 : i32 to vector<16x1xi32>
    %14 = arith.cmpi slt, %12, %13 : vector<16x1xi32>
    %cst_6 = arith.constant 0.000000e+00 : f32
    %15 = vector.shape_cast %14 : vector<16x1xi1> to vector<16x1xi1>
    %16 = vector.broadcast %15 : vector<16x1xi1> to vector<16x128xi1>
    %17 = vector.broadcast %cst_6 : f32 to vector<16x128xf32>
    %18 = arith.select %16, %8, %17 : vector<16x128xi1>, vector<16x128xf32>
    %c0_7 = arith.constant 0 : index
    %c0_8 = arith.constant 0 : index
    %19 = vector.load %arg5[%c0_7, %c0_8] : memref<1x128xf32, #tpu.memory_space<vmem>>, vector<1x128xf32>
    %cst_9 = arith.constant dense<0.000000e+00> : vector<128xf32>
    %20 = vector.multi_reduction <add>, %18, %cst_9 [0] : vector<16x128xf32> to vector<128xf32>
    %21 = vector.shape_cast %20 : vector<128xf32> to vector<1x128xf32>
    %22 = arith.addf %19, %21 : vector<1x128xf32>
    %c0_10 = arith.constant 0 : index
    %c0_11 = arith.constant 0 : index
    %23 = vector.load %arg5[%c0_10, %c0_11] : memref<1x128xf32, #tpu.memory_space<vmem>>, vector<1x128xf32>
    tpu.vector_store %arg5[%c0_10, %c0_11], %22 {strides = array<i32>} : memref<1x128xf32, #tpu.memory_space<vmem>>, vector<1x128xf32>,
    %c0_12 = arith.constant 0 : index
    %c0_13 = arith.constant 0 : index
    %24 = vector.load %arg6[%c0_12, %c0_13] : memref<1x128xf32, #tpu.memory_space<vmem>>, vector<1x128xf32>
    %25 = arith.mulf %18, %18 : vector<16x128xf32>
    %cst_14 = arith.constant dense<0.000000e+00> : vector<128xf32>
    %26 = vector.multi_reduction <add>, %25, %cst_14 [0] : vector<16x128xf32> to vector<128xf32>
    %27 = vector.shape_cast %26 : vector<128xf32> to vector<1x128xf32>
    %28 = arith.addf %24, %27 : vector<1x128xf32>
    %c0_15 = arith.constant 0 : index
    %c0_16 = arith.constant 0 : index
    %29 = vector.load %arg6[%c0_15, %c0_16] : memref<1x128xf32, #tpu.memory_space<vmem>>, vector<1x128xf32>
    tpu.vector_store %arg6[%c0_15, %c0_16], %28 {strides = array<i32>} : memref<1x128xf32, #tpu.memory_space<vmem>>, vector<1x128xf32>,
    %c0_i32_17 = arith.constant 0 : i32
    %30 = arith.cmpi eq, %arg0, %c0_i32_17 : i32
    %31 = arith.extui %30 : i1 to i32
    %c0_i32_18 = arith.constant 0 : i32
    %32 = arith.cmpi ne, %31, %c0_i32_18 : i32
    scf.if %32 {
      %c0_19 = arith.constant 0 : index
      %c0_20 = arith.constant 0 : index
      %33 = vector.load %arg5[%c0_19, %c0_20] : memref<1x128xf32, #tpu.memory_space<vmem>>, vector<1x128xf32>
      %cst_21 = arith.constant 1.250000e-01 : f32
      %34 = vector.broadcast %cst_21 : f32 to vector<1x128xf32>
      %35 = arith.mulf %33, %34 : vector<1x128xf32>
      %c0_22 = arith.constant 0 : index
      %c0_23 = arith.constant 0 : index
      %36 = vector.load %arg6[%c0_22, %c0_23] : memref<1x128xf32, #tpu.memory_space<vmem>>, vector<1x128xf32>
      %cst_24 = arith.constant 1.250000e-01 : f32
      %37 = vector.broadcast %cst_24 : f32 to vector<1x128xf32>
      %38 = arith.mulf %36, %37 : vector<1x128xf32>
      %39 = arith.mulf %35, %35 : vector<1x128xf32>
      %40 = arith.subf %38, %39 : vector<1x128xf32>
      %cst_25 = arith.constant 0.000000e+00 : f32
      %41 = vector.broadcast %cst_25 : f32 to vector<1x128xf32>
      %42 = arith.maximumf %40, %41 : vector<1x128xf32>
      %c0_26 = arith.constant 0 : index
      %c0_27 = arith.constant 0 : index
      %43 = vector.load %arg7[%c0_26, %c0_27] : memref<1x128xf32, #tpu.memory_space<vmem>>, vector<1x128xf32>
      %44 = arith.addf %35, %43 : vector<1x128xf32>
      %c0_28 = arith.constant 0 : index
      %c0_29 = arith.constant 0 : index
      %45 = vector.load %arg3[%c0_28, %c0_29] : memref<2x128xf32, #tpu.memory_space<vmem>>, vector<1x128xf32>
      %cst_30 = arith.constant 9.99999974E-6 : f32
      %46 = vector.broadcast %cst_30 : f32 to vector<1x128xf32>
      %47 = arith.addf %42, %46 : vector<1x128xf32>
      %48 = math.rsqrt %47 : vector<1x128xf32>
      %49 = arith.mulf %45, %48 : vector<1x128xf32>
      %c0_31 = arith.constant 0 : index
      %c0_32 = arith.constant 0 : index
      %50 = vector.load %arg4[%c0_31, %c0_32] : memref<2x128xf32, #tpu.memory_space<vmem>>, vector<1x128xf32>
      tpu.vector_store %arg4[%c0_31, %c0_32], %49 {strides = array<i32>} : memref<2x128xf32, #tpu.memory_space<vmem>>, vector<1x128xf32>,
      %c1 = arith.constant 1 : index
      %c0_33 = arith.constant 0 : index
      %51 = vector.load %arg3[%c1, %c0_33] : memref<2x128xf32, #tpu.memory_space<vmem>>, vector<1x128xf32>
      %52 = arith.mulf %44, %49 : vector<1x128xf32>
      %53 = arith.subf %51, %52 : vector<1x128xf32>
      %c1_34 = arith.constant 1 : index
      %c0_35 = arith.constant 0 : index
      %54 = vector.load %arg4[%c1_34, %c0_35] : memref<2x128xf32, #tpu.memory_space<vmem>>, vector<1x128xf32>
      tpu.vector_store %arg4[%c1_34, %c0_35], %53 {strides = array<i32>} : memref<2x128xf32, #tpu.memory_space<vmem>>, vector<1x128xf32>,
    } else {
    }
    return
  }
  func.func @transform_0(%arg0: i32) -> (i32, i32) {
    %c0_i32 = arith.constant 0 : i32
    %c0_i32_0 = arith.constant 0 : i32
    return %arg0, %c0_i32 : i32, i32
  }
  func.func @transform_1(%arg0: i32) -> (i32, i32) {
    %c0_i32 = arith.constant 0 : i32
    %c0_i32_0 = arith.constant 0 : i32
    %c0_i32_1 = arith.constant 0 : i32
    return %c0_i32, %c0_i32_0 : i32, i32
  }
  func.func @transform_2(%arg0: i32) -> (i32, i32) {
    %c0_i32 = arith.constant 0 : i32
    %c0_i32_0 = arith.constant 0 : i32
    %c0_i32_1 = arith.constant 0 : i32
    return %c0_i32, %c0_i32_0 : i32, i32
  }
  func.func @transform_3(%arg0: i32) -> (i32, i32) {
    %c0_i32 = arith.constant 0 : i32
    %c0_i32_0 = arith.constant 0 : i32
    %c0_i32_1 = arith.constant 0 : i32
    return %c0_i32, %c0_i32_0 : i32, i32
  }
}

</mosaic_0001>

<llo_original>
// kernel: tpu_custom_call.1
$region0: #{tpu_custom_call.1}
  #allocation0 [shape = 'u32[]', space=smem, size = 0x4, offset = 0x4, fixed_abs, tag = 'smem constant byte address 0x4 - core index']
  #allocation1 [shape = 'u32[144,128]{1,0:T(1,128)}', space=vmem, size = 0x12000, scoped, tag = 'internal scratch']
  #allocation2 [shape = 'f32[1,128]{1,0:T(1,128)}', space=vmem, size = 0x200, scoped, tag = 'scratch operand']
  #allocation3 [shape = 'f32[1,128]{1,0:T(1,128)}', space=vmem, size = 0x200, scoped, tag = 'scratch operand']
  #allocation4 [shape = 'f32[1,128]{1,0:T(1,128)}', space=vmem, size = 0x200, scoped, tag = 'scratch operand']
  %s0 = inlined_call_operand.hbm [shape: bf16[16,32], index: 0, kind: input, shape index: {}]
  %s1 = inlined_call_operand.hbm [shape: bf16[32,128], index: 1, kind: input, shape index: {}]
  %s2 = inlined_call_operand.vmem [shape: f32[2,128], index: 2, kind: input, shape index: {}]
  %s3 = inlined_call_operand.hbm [shape: f32[2,128], index: 3, kind: output, shape index: {}]
  %s4 = sld [smem:[#allocation0]]
  $region38: #{tpu_custom_call.1} parent=0
    _
  %s6 = ssub.s32 1, %s4
  %s7 = scalar_select 0, %s6, %s4
  $region1: #{tpu_custom_call.1} parent=0
    #allocation5 [shape = 'u8[4096]{0}', space=vmem, size = 0x1000, scoped, tag = 'input window, operand 0, single buffered']
    #allocation6 [shape = 's32[1]{0}', space=sflag, size = 0x4, scoped, tag = 'scoped memory for tpu_custom_call.1']
    #allocation7 [shape = 's32[1]{0}', space=sflag, size = 0x4, scoped, tag = 'scoped memory for tpu_custom_call.1']
    #allocation8 [shape = 'u8[8192]{0}', space=vmem, size = 0x2000, scoped, tag = 'input window, operand 1, single buffered']
    #allocation9 [shape = 's32[1]{0}', space=sflag, size = 0x4, scoped, tag = 'scoped memory for tpu_custom_call.1']
    #allocation10 [shape = 'u8[1024]{0}', space=vmem, size = 0x400, scoped, tag = 'output window, operand 0, single buffered']
    %8 = vsyncpa [#allocation6], 0
    %9 = vsyncpa [#allocation9], 0
    %10 = vsyncpa [#allocation7], 0
    // Predicated region
    $region2: #{tpu_custom_call.1} parent=1 // pred_check
      _
    $region3: #{tpu_custom_call.1} parent=1 // pred_check_branch
      %12 = sbr.rel (0) target = $region5
    $region4: #{tpu_custom_call.1} parent=1 // pred_region
      %s14 = ssub.s32 128, 128
      %15 = vsyncadd [#allocation6], %s14
      %s16 = sshll.u32 [#allocation5], 4
      %s17 = int_to_ptr.vmem [resolvable:$true] %s16
      %22 = dma.hbm_to_vmem [thread:$0]  %s0, 128, %s17, [#allocation6], 64, 64, 4
    $region5: #{tpu_custom_call.1} parent=1 // pred_fallthru
      _
    // Predicated region
    $region6: #{tpu_custom_call.1} parent=1 // pred_check
      _
    $region7: #{tpu_custom_call.1} parent=1 // pred_check_branch
      %24 = sbr.rel (0) target = $region9
    $region8: #{tpu_custom_call.1} parent=1 // pred_region
      %s26 = ssub.s32 256, 256
      %27 = vsyncadd [#allocation9], %s26
      %s28 = sshll.u32 [#allocation8], 4
      %s29 = int_to_ptr.vmem [resolvable:$true] %s28
      %34 = dma.hbm_to_vmem [thread:$0]  %s1, 256, %s29, [#allocation9], 64, 64, 4
    $region9: #{tpu_custom_call.1} parent=1 // pred_fallthru
      _
    // Predicated region
    $region10: #{tpu_custom_call.1} parent=1 // pred_check
      _
    $region11: #{tpu_custom_call.1} parent=1 // pred_check_branch
      %36 = sbr.rel (0) target = $region13
    $region12: #{tpu_custom_call.1} parent=1 // pred_region
      _
    $region13: #{tpu_custom_call.1} parent=1 // pred_fallthru
      _
    // Predicated region
    $region14: #{tpu_custom_call.1} parent=1 // pred_check
      _
    $region15: #{tpu_custom_call.1} parent=1 // pred_check_branch
      %38 = sbr.rel (0) target = $region17
    $region16: #{tpu_custom_call.1} parent=1 // pred_region
      %39 = dma.done [#allocation6], 128
    $region17: #{tpu_custom_call.1} parent=1 // pred_fallthru
      _
    // Predicated region
    $region18: #{tpu_custom_call.1} parent=1 // pred_check
      _
    $region19: #{tpu_custom_call.1} parent=1 // pred_check_branch
      %41 = sbr.rel (0) target = $region21
    $region20: #{tpu_custom_call.1} parent=1 // pred_region
      %42 = dma.done [#allocation9], 256
    $region21: #{tpu_custom_call.1} parent=1 // pred_fallthru
      _
    %v44 = vld [vmem:[#allocation5] sm:$0xf]
    %v45 = vld [vmem:[#allocation5 + $0x4] sm:$0xf]
    %v46 = vld [vmem:[#allocation8] sm:$0xf]
    %v47 = vld [vmem:[#allocation8 + $0x4] sm:$0xf]
    %v48 = vld [vmem:[#allocation8 + $0x8] sm:$0xf]
    %v49 = vld [vmem:[#allocation8 + $0xc] sm:$0xf]
    %v52 = vunpack.c.l.b16 %v44
    %v53 = vunpack.c.l.b16 %v45
    %v54 = vpack.c.b16 %v53, %v52
    %v59 = vunpack.c.l.b16 %v46
    %v60 = vunpack.c.l.b16 %v47
    %v61 = vunpack.c.l.b16 %v48
    %v62 = vunpack.c.l.b16 %v49
    %v63 = vpack.c.b16 %v60, %v59
    %v64 = vpack.c.b16 %v62, %v61
    %vm67 = vcmask 261120
    %v69 = vsel %vm67, %v54, 0
    %71 = vmatprep.subr.bf16.mxu0 0
    %72 = vmatpush1.bf16.msra.mxu0 %v63
    %73 = vmatprep.subr.bf16.mxu0 0
    %74 = vmatpush1.bf16.msra.mxu0 %v64
    %75 = vmatprep.subr.bf16.mxu0 0
    %76 = vmatpush1.bf16.msra.mxu0 0
    %77 = vmatprep.subr.bf16.mxu0 0
    %78 = vmatpush1.bf16.msra.mxu0 0
    %79 = vmatprep.subr.bf16.mxu0 0
    %80 = vmatpush1.bf16.msra.mxu0 0
    %81 = vmatprep.subr.bf16.mxu0 0
    %82 = vmatpush1.bf16.msra.mxu0 0
    %83 = vmatprep.subr.bf16.mxu0 0
    %84 = vmatpush1.bf16.msra.mxu0 0
    %85 = vmatprep.subr.bf16.mxu0 0
    %86 = vmatpush1.bf16.msra.mxu0 0
    %87 = vmatprep.subr.bf16.mxu0 0
    %88 = vmatpush1.bf16.msra.mxu0 0
    %89 = vmatprep.subr.bf16.mxu0 0
    %90 = vmatpush1.bf16.msra.mxu0 0
    %91 = vmatprep.subr.bf16.mxu0 0
    %92 = vmatpush1.bf16.msra.mxu0 0
    %93 = vmatprep.subr.bf16.mxu0 0
    %94 = vmatpush1.bf16.msra.mxu0 0
    %95 = vmatprep.subr.bf16.mxu0 0
    %96 = vmatpush1.bf16.msra.mxu0 0
    %97 = vmatprep.subr.bf16.mxu0 0
    %98 = vmatpush1.bf16.msra.mxu0 0
    %99 = vmatprep.subr.bf16.mxu0 0
    %100 = vmatpush1.bf16.msra.mxu0 0
    %101 = vmatprep.subr.bf16.mxu0 0
    %102 = vmatpush1.bf16.msra.mxu0 0
    %103 = vmatprep.mubr.bf16.mxu0 0
    %104 = vmatmul.mubr.bf16.gmra.mrb[0].mxu0 %v69
    %v105 = vpop.f32.mrb[0].mxu0
    %v106 = vadd.f32 0.0, %v105
    %v107 = vpop.f32.mrb[0].mxu0
    %v108 = vpop.f32.mrb[0].mxu0
    %v109 = vadd.f32 0.0, %v108
    %v110 = vpop.f32.mrb[0].mxu0
    %111 = vdwg.mxu0
    %p112 = scmp.eq.s32.totalorder 0, 0
    // Predicated region
    $region22: #{tpu_custom_call.1} parent=1 // pred_check
      %p113 = pneg %p112
    $region23: #{tpu_custom_call.1} parent=1 // pred_check_branch
      %115 = sbr.rel (%p113) target = $region25
    $region24: #{tpu_custom_call.1} parent=1 // pred_region
      %v116 = vadd.f32 %v106, %v109
      %v117 = vrot.slane %v116, 4
      %v118 = vadd.f32 %v116, %v117
      %v119 = vrot.slane %v118, 2
      %v120 = vadd.f32 %v118, %v119
      %v121 = vrot.slane %v120, 1
      %v122 = vadd.f32 %v120, %v121
      %v123 = vmul.f32 %v122, 0.0625
      %124 = vst [vmem:[#allocation4] sm:$0x1] %v123
      %125 = vst [vmem:[#allocation2] sm:$0x1] 0.0
      %126 = vst [vmem:[#allocation3] sm:$0x1] 0.0
    $region25: #{tpu_custom_call.1} parent=1 // pred_fallthru
      _
    %v127 = vld [vmem:[#allocation4] sm:$0x1]
    %v129 = vlaneseq
    %v130 = vshrl.u32 %v129, 7
    %v131 = vsub.s32 0, %v130
    %v132 = vrot.slane %v127, %v131
    %v134 = vsub.f32 %v106, %v132
    %v135 = vsub.f32 %v109, %v132
    %s136 = smul.u32 0, 16
    %v137 = vlaneseq
    %v138 = vshrl.u32 %v137, 7
    %v139 = vadd.s32 %v138, 8
    %v140 = vstv %s136
    %v141 = vadd.s32 %v140, %v138
    %v142 = vadd.s32 %v140, %v139
    %vm143 = vcmp.lt.s32.totalorder %v141, 8
    %vm144 = vcmp.lt.s32.totalorder %v142, 8
    %v145 = vsel %vm143, 1, 0
    %v146 = vsel %vm144, 1, 0
    %vm147 = vcmp.eq.s32.totalorder %v145, 1
    %vm148 = vcmp.eq.s32.totalorder %v146, 1
    %v149 = vsel %vm147, %v134, 0.0
    %v150 = vsel %vm148, %v135, 0.0
    %v151 = vld [vmem:[#allocation2] sm:$0x1]
    %v152 = vadd.f32 %v149, %v150
    %v153 = vrot.slane %v152, 4
    %v154 = vadd.f32 %v152, %v153
    %v155 = vrot.slane %v154, 2
    %v156 = vadd.f32 %v154, %v155
    %v157 = vrot.slane %v156, 1
    %v158 = vadd.f32 %v156, %v157
    %v159 = vadd.f32 %v151, %v158
    %160 = vst [vmem:[#allocation2] sm:$0x1] %v159
    %v161 = vld [vmem:[#allocation3] sm:$0x1]
    %v162 = vmul.f32 %v149, %v149
    %v163 = vmul.f32 %v150, %v150
    %v164 = vadd.f32 %v162, %v163
    %v165 = vrot.slane %v164, 4
    %v166 = vadd.f32 %v164, %v165
    %v167 = vrot.slane %v166, 2
    %v168 = vadd.f32 %v166, %v167
    %v169 = vrot.slane %v168, 1
    %v170 = vadd.f32 %v168, %v169
    %v171 = vadd.f32 %v161, %v170
    %172 = vst [vmem:[#allocation3] sm:$0x1] %v171
    // Predicated region
    $region26: #{tpu_custom_call.1} parent=1 // pred_check
      %p173 = pneg %p112
    $region27: #{tpu_custom_call.1} parent=1 // pred_check_branch
      %175 = sbr.rel (%p173) target = $region29
    $region28: #{tpu_custom_call.1} parent=1 // pred_region
      %v176 = vld [vmem:[#allocation2] sm:$0x1]
      %v177 = vmul.f32 %v176, 0.125
      %v178 = vld [vmem:[#allocation3] sm:$0x1]
      %v179 = vmul.f32 %v178, 0.125
      %v180 = vmul.f32 %v177, %v177
      %v181 = vsub.f32 %v179, %v180
      %v182 = vmax.f32 %v181, 0.0
      %v183 = vld [vmem:[#allocation4] sm:$0x1]
      %v184 = vadd.f32 %v177, %v183
      %v185 = vld [vmem:[%s2] sm:$0x1]
      %v186 = vadd.f32 %v182, 1e-05
      %v187 = vrsqrt.pop %v186
      %v188 = vmul.f32 %v185, %v187
      %189 = vst [vmem:[#allocation10] sm:$0x1] %v188
      %v190 = vld [vmem:[%s2 + $0x1] sm:$0x1]
      %v191 = vmul.f32 %v184, %v188
      %v192 = vsub.f32 %v190, %v191
      %193 = vst [vmem:[#allocation10 + $0x1] sm:$0x1] %v192
    $region29: #{tpu_custom_call.1} parent=1 // pred_fallthru
      _
    // Predicated region
    $region30: #{tpu_custom_call.1} parent=1 // pred_check
      _
    $region31: #{tpu_custom_call.1} parent=1 // pred_check_branch
      %195 = sbr.rel (0) target = $region33
    $region32: #{tpu_custom_call.1} parent=1 // pred_region
      %s197 = ssub.s32 32, 32
      %198 = vsyncadd [#allocation7], %s197
      %s200 = sshll.u32 [#allocation10], 4
      %s201 = int_to_ptr.vmem [resolvable:$true] %s200
      %203 = dma.vmem_to_hbm [thread:$0]  %s201, 32, %s3, [#allocation7]
    $region33: #{tpu_custom_call.1} parent=1 // pred_fallthru
      _
    // Predicated region
    $region34: #{tpu_custom_call.1} parent=1 // pred_check
      _
    $region35: #{tpu_custom_call.1} parent=1 // pred_check_branch
      %205 = sbr.rel (0) target = $region37
    $region36: #{tpu_custom_call.1} parent=1 // pred_region
      %206 = dma.done [#allocation7], 32
    $region37: #{tpu_custom_call.1} parent=1 // pred_fallthru
      _
    %207 = vsyncpa [#allocation6], 1
    %208 = vsyncpa [#allocation9], 1
    %209 = vsyncpa [#allocation7], 1

</llo_original>
